<compile_context>
chip_gen: v6e
topology: v6e:2x2x1
jax: 0.10.0
libtpu: 0.0.40
codegen_flags: <defaults>
</compile_context>

<pallas_src>
import functools

import jax
import jax.numpy as jnp
from jax.experimental import pallas as pl
from jax.experimental.pallas import tpu as pltpu

GAMMA = 2.0
ALPHA = 0.25
LAMBDA_INITIAL = 0.4

_LANES = 128
_MAX_ROW_BLOCK = 4096          # 4096 * 128 * 4 B = 2 MiB per f32 input block
_PAD_LOGIT = -1e4              # padded (logit=-1e4, target=0) element contributes exactly 0


def _modulating(one_minus_pt, gamma):
    """(1 - p_t) ** gamma with an integer-exponent fast path (avoids exp+log on the EUP)."""
    g = float(gamma)
    if g == 2.0:
        return one_minus_pt * one_minus_pt
    if g.is_integer() and 1.0 <= g <= 8.0:
        r = one_minus_pt
        for _ in range(int(g) - 1):
            r = r * one_minus_pt
        return r
    return one_minus_pt ** g


def _focal_term(x, t, w, alpha_t, gamma):
    """Per-element alpha_t * (1 - p_t)^gamma * BCEWithLogits(x, t); w = 1 - 2*t.

    EUP-fused: a single exp(-|x|) feeds both the stable log1p term and sigmoid(x);
    1 - p_t is computed directly as t + sigmoid(x) * (1 - 2*t).
    """
    e = jnp.exp(-jnp.abs(x))                              # shared by BCE log1p and sigmoid
    ce = jnp.maximum(x, 0.0) - x * t + jnp.log1p(e)       # stable BCE-with-logits
    inv = 1.0 / (1.0 + e)                                 # exact divide (keeps rtol=2e-5)
    prob = inv * jnp.where(x >= 0.0, 1.0, e)              # sigmoid(x) from the same e
    one_minus_pt = t + prob * w                           # == 1 - p_t
    return alpha_t * _modulating(one_minus_pt, gamma) * ce


def unified_focal_kernel(li_ref, lr_ref, t_ref, out_ref, *, gamma, alpha, lam):
    k = pl.program_id(1)

    # Output block index is constant along k -> out_ref is the resident accumulator.
    @pl.when(k == 0)
    def _init():
        out_ref[...] = jnp.zeros_like(out_ref)

    x_i = li_ref[...].astype(jnp.float32)
    x_r = lr_ref[...].astype(jnp.float32)
    t = t_ref[...].astype(jnp.float32)

    # Target-only factors, computed once and shared by both focal terms.
    w = 1.0 - 2.0 * t                                     # 1 - p_t = t + prob * w
    alpha_t = (1.0 - alpha) + (2.0 * alpha - 1.0) * t     # alpha*t + (1-alpha)*(1-t)

    term = (lam * _focal_term(x_i, t, w, alpha_t, gamma)
            + (1.0 - lam) * _focal_term(x_r, t, w, alpha_t, gamma))

    rows, lanes = term.shape
    # Tile-preserving reshape ((..., 8, 128) minor dims unchanged) -> pure VPU vreg adds;
    # the single cross-lane/sublane reduction happens once in the wrapper.
    out_ref[...] += term.reshape(rows // 8, 8, lanes).sum(axis=0)


def _detect_grid_parallelism():
    """Best effort: engage both TensorCores on v7x; single sequential grid elsewhere."""
    try:
        kind = jax.devices()[0].device_kind.lower()
    except Exception:
        kind = ""
    if "v7" in kind:
        return 2, (pltpu.CORE_PARALLEL, pltpu.ARBITRARY)
    return 1, ("arbitrary", "arbitrary")


def unified_focal_loss(logits_init, logits_ref, targets, *,
                       gamma=GAMMA, alpha=ALPHA, lambda_initial=LAMBDA_INITIAL,
                       num_parallel=None, dimension_semantics=None,
                       max_row_block=_MAX_ROW_BLOCK):
    assert logits_init.shape == logits_ref.shape == targets.shape
    n_elems = int(logits_init.size)

    if num_parallel is None:
        num_parallel, detected_sem = _detect_grid_parallelism()
        if dimension_semantics is None:
            dimension_semantics = detected_sem
    if dimension_semantics is None:
        dimension_semantics = (("parallel" if num_parallel > 1 else "arbitrary"),
                               "arbitrary")

    # ---- tiling: lane-dense (rows_pad, 128) slab, at most ~one ragged block of padding ----
    n_rows = pl.cdiv(n_elems, _LANES)
    rows_per_core = pl.cdiv(n_rows, num_parallel)
    num_k = pl.cdiv(rows_per_core, max_row_block)
    row_block = ((pl.cdiv(rows_per_core, num_k) + 7) // 8) * 8
    rows_pad = num_parallel * num_k * row_block
    pad = rows_pad * _LANES - n_elems

    def _prep(a, pad_value):
        # Dtype passed through unchanged (bf16 targets/logits OK; widened in-kernel).
        a = a.reshape(-1)
        if pad:  # lane/block-aligned inputs skip this: reshape alone is a free view
            a = jnp.pad(a, (0, pad), constant_values=pad_value)
        return a.reshape(rows_pad, _LANES)

    li = _prep(logits_init, _PAD_LOGIT)
    lr = _prep(logits_ref, _PAD_LOGIT)
    tg = _prep(targets, 0)

    kernel = functools.partial(unified_focal_kernel, gamma=float(gamma),
                               alpha=float(alpha), lam=float(lambda_initial))

    in_spec = pl.BlockSpec((row_block, _LANES), lambda p, k: (p * num_k + k, 0))

    partial_sums = pl.pallas_call(
        kernel,
        out_shape=jax.ShapeDtypeStruct((num_parallel * 8, _LANES), jnp.float32),
        grid_spec=pltpu.PrefetchScalarGridSpec(
            num_scalar_prefetch=0,
            grid=(num_parallel, num_k),
            in_specs=[in_spec, in_spec, in_spec],
            out_specs=pl.BlockSpec((8, _LANES), lambda p, k: (p, 0)),
        ),
        compiler_params=pltpu.CompilerParams(
            dimension_semantics=tuple(dimension_semantics),
            vmem_limit_bytes=32 * 1024 * 1024),
    )(li, lr, tg)

    # Single cross-lane/sublane reduction + mean (same element count for both terms).
    return jnp.sum(partial_sums) / jnp.float32(n_elems)


def _reference(logits_init, logits_ref, targets,
               gamma=GAMMA, alpha=ALPHA, lam=LAMBDA_INITIAL):
    def focal(x, t):
        x = x.astype(jnp.float32)
        t = t.astype(jnp.float32)
        ce = jnp.maximum(x, 0.0) - x * t + jnp.log1p(jnp.exp(-jnp.abs(x)))
        prob = jax.nn.sigmoid(x)
        p_t = prob * t + (1 - prob) * (1 - t)
        mod = (1 - p_t) ** gamma
        alpha_t = alpha * t + (1 - alpha) * (1 - t)
        return jnp.mean(alpha_t * mod * ce)

    return lam * focal(logits_init, targets) + (1 - lam) * focal(logits_ref, targets)


if __name__ == "__main__":
    key = jax.random.PRNGKey(0)

    # case 1: lane/block-aligned (zero-copy wrapper path) + bf16 targets (exact for 0/1);
    # case 2: ragged shape (padding path) + forced 2-wide leading grid axis.
    cases = [
        ((16, 128), jnp.bfloat16, None),
        ((7, 137), jnp.float32, 2),
    ]
    for (B, C), t_dtype, n_par in cases:
        k1, k2, k3 = jax.random.split(jax.random.fold_in(key, B * 1000 + C), 3)
        logits_init = jax.random.normal(k1, (B, C), dtype=jnp.float32) * 2.0
        logits_ref = jax.random.normal(k2, (B, C), dtype=jnp.float32) * 2.0
        targets = (jax.random.uniform(k3, (B, C)) > 0.8).astype(t_dtype)

        loss = jax.block_until_ready(
            unified_focal_loss(logits_init, logits_ref, targets, num_parallel=n_par))
        ref = _reference(logits_init, logits_ref, targets.astype(jnp.float32))
        assert jnp.allclose(loss, ref, rtol=2e-5, atol=1e-6), ((B, C), loss, ref)

    print("KERNEL_OK")
</pallas_src>

<mosaic_0001>
module attributes {stable_mosaic.version = 11 : i64} {
  func.func @unified_focal_kernel(%arg0: i32, %arg1: i32, %arg2: memref<16x128xf32, #tpu.memory_space<vmem>>, %arg3: memref<16x128xf32, #tpu.memory_space<vmem>>, %arg4: memref<16x128xbf16, #tpu.memory_space<vmem>>, %arg5: memref<8x128xf32, #tpu.memory_space<vmem>>) attributes {dimension_semantics = [#tpu.dimension_semantics<arbitrary>, #tpu.dimension_semantics<arbitrary>], iteration_bounds = array<i64: 1, 1>, scalar_prefetch = 0 : i64, scratch_operands = 0 : i64, tpu.core_type = #tpu.core_type<tc>, window_params = [{transform_indices = @transform_0, window_bounds = array<i64: 16, 128>}, {transform_indices = @transform_1, window_bounds = array<i64: 16, 128>}, {transform_indices = @transform_2, window_bounds = array<i64: 16, 128>}, {transform_indices = @transform_3, window_bounds = array<i64: 8, 128>}]} {
    %c0_i32 = arith.constant 0 : i32
    %0 = arith.cmpi eq, %arg1, %c0_i32 : i32
    %1 = arith.extui %0 : i1 to i32
    %c0_i32_0 = arith.constant 0 : i32
    %2 = arith.cmpi ne, %1, %c0_i32_0 : i32
    scf.if %2 {
      %cst_28 = arith.constant 0.000000e+00 : f32
      %73 = vector.broadcast %cst_28 : f32 to vector<8x128xf32>
      %c0_29 = arith.constant 0 : index
      %c0_30 = arith.constant 0 : index
      %74 = vector.load %arg5[%c0_29, %c0_30] : memref<8x128xf32, #tpu.memory_space<vmem>>, vector<8x128xf32>
      tpu.vector_store %arg5[%c0_29, %c0_30], %73 {strides = array<i32>} : memref<8x128xf32, #tpu.memory_space<vmem>>, vector<8x128xf32>,
    } else {
    }
    %c0 = arith.constant 0 : index
    %c0_1 = arith.constant 0 : index
    %3 = vector.load %arg2[%c0, %c0_1] : memref<16x128xf32, #tpu.memory_space<vmem>>, vector<16x128xf32>
    %c0_2 = arith.constant 0 : index
    %c0_3 = arith.constant 0 : index
    %4 = vector.load %arg3[%c0_2, %c0_3] : memref<16x128xf32, #tpu.memory_space<vmem>>, vector<16x128xf32>
    %c0_4 = arith.constant 0 : index
    %c0_5 = arith.constant 0 : index
    %5 = vector.load %arg4[%c0_4, %c0_5] : memref<16x128xbf16, #tpu.memory_space<vmem>>, vector<16x128xbf16>
    %6 = arith.extf %5 : vector<16x128xbf16> to vector<16x128xf32>
    %cst = arith.constant 2.000000e+00 : f32
    %7 = vector.broadcast %cst : f32 to vector<16x128xf32>
    %8 = arith.mulf %7, %6 : vector<16x128xf32>
    %cst_6 = arith.constant 1.000000e+00 : f32
    %9 = vector.broadcast %cst_6 : f32 to vector<16x128xf32>
    %10 = arith.subf %9, %8 : vector<16x128xf32>
    %cst_7 = arith.constant -5.000000e-01 : f32
    %11 = vector.broadcast %cst_7 : f32 to vector<16x128xf32>
    %12 = arith.mulf %11, %6 : vector<16x128xf32>
    %cst_8 = arith.constant 7.500000e-01 : f32
    %13 = vector.broadcast %cst_8 : f32 to vector<16x128xf32>
    %14 = arith.addf %13, %12 : vector<16x128xf32>
    %15 = math.absf %3 : vector<16x128xf32>
    %cst_9 = arith.constant 0.000000e+00 : f32
    %16 = vector.broadcast %cst_9 : f32 to vector<16x128xf32>
    %17 = arith.subf %16, %15 : vector<16x128xf32>
    %18 = math.exp %17 : vector<16x128xf32>
    %cst_10 = arith.constant 0.000000e+00 : f32
    %19 = vector.broadcast %cst_10 : f32 to vector<16x128xf32>
    %20 = arith.maximumf %3, %19 : vector<16x128xf32>
    %21 = arith.mulf %3, %6 : vector<16x128xf32>
    %22 = arith.subf %20, %21 : vector<16x128xf32>
    %23 = math.log1p %18 : vector<16x128xf32>
    %24 = arith.addf %22, %23 : vector<16x128xf32>
    %cst_11 = arith.constant 1.000000e+00 : f32
    %25 = vector.broadcast %cst_11 : f32 to vector<16x128xf32>
    %26 = arith.addf %25, %18 : vector<16x128xf32>
    %cst_12 = arith.constant 1.000000e+00 : f32
    %27 = vector.broadcast %cst_12 : f32 to vector<16x128xf32>
    %28 = arith.divf %27, %26 : vector<16x128xf32>
    %cst_13 = arith.constant 0.000000e+00 : f32
    %29 = vector.broadcast %cst_13 : f32 to vector<16x128xf32>
    %30 = arith.cmpf oge, %3, %29 : vector<16x128xf32>
    %cst_14 = arith.constant 1.000000e+00 : f32
    %31 = vector.broadcast %cst_14 : f32 to vector<16x128xf32>
    %32 = arith.select %30, %31, %18 : vector<16x128xi1>, vector<16x128xf32>
    %33 = arith.mulf %28, %32 : vector<16x128xf32>
    %34 = arith.mulf %33, %10 : vector<16x128xf32>
    %35 = arith.addf %6, %34 : vector<16x128xf32>
    %36 = arith.mulf %35, %35 : vector<16x128xf32>
    %37 = arith.mulf %14, %36 : vector<16x128xf32>
    %38 = arith.mulf %37, %24 : vector<16x128xf32>
    %cst_15 = arith.constant 4.000000e-01 : f32
    %39 = vector.broadcast %cst_15 : f32 to vector<16x128xf32>
    %40 = arith.mulf %39, %38 : vector<16x128xf32>
    %41 = math.absf %4 : vector<16x128xf32>
    %cst_16 = arith.constant 0.000000e+00 : f32
    %42 = vector.broadcast %cst_16 : f32 to vector<16x128xf32>
    %43 = arith.subf %42, %41 : vector<16x128xf32>
    %44 = math.exp %43 : vector<16x128xf32>
    %cst_17 = arith.constant 0.000000e+00 : f32
    %45 = vector.broadcast %cst_17 : f32 to vector<16x128xf32>
    %46 = arith.maximumf %4, %45 : vector<16x128xf32>
    %47 = arith.mulf %4, %6 : vector<16x128xf32>
    %48 = arith.subf %46, %47 : vector<16x128xf32>
    %49 = math.log1p %44 : vector<16x128xf32>
    %50 = arith.addf %48, %49 : vector<16x128xf32>
    %cst_18 = arith.constant 1.000000e+00 : f32
    %51 = vector.broadcast %cst_18 : f32 to vector<16x128xf32>
    %52 = arith.addf %51, %44 : vector<16x128xf32>
    %cst_19 = arith.constant 1.000000e+00 : f32
    %53 = vector.broadcast %cst_19 : f32 to vector<16x128xf32>
    %54 = arith.divf %53, %52 : vector<16x128xf32>
    %cst_20 = arith.constant 0.000000e+00 : f32
    %55 = vector.broadcast %cst_20 : f32 to vector<16x128xf32>
    %56 = arith.cmpf oge, %4, %55 : vector<16x128xf32>
    %cst_21 = arith.constant 1.000000e+00 : f32
    %57 = vector.broadcast %cst_21 : f32 to vector<16x128xf32>
    %58 = arith.select %56, %57, %44 : vector<16x128xi1>, vector<16x128xf32>
    %59 = arith.mulf %54, %58 : vector<16x128xf32>
    %60 = arith.mulf %59, %10 : vector<16x128xf32>
    %61 = arith.addf %6, %60 : vector<16x128xf32>
    %62 = arith.mulf %61, %61 : vector<16x128xf32>
    %63 = arith.mulf %14, %62 : vector<16x128xf32>
    %64 = arith.mulf %63, %50 : vector<16x128xf32>
    %cst_22 = arith.constant 6.000000e-01 : f32
    %65 = vector.broadcast %cst_22 : f32 to vector<16x128xf32>
    %66 = arith.mulf %65, %64 : vector<16x128xf32>
    %67 = arith.addf %40, %66 : vector<16x128xf32>
    %c0_23 = arith.constant 0 : index
    %c0_24 = arith.constant 0 : index
    %68 = vector.load %arg5[%c0_23, %c0_24] : memref<8x128xf32, #tpu.memory_space<vmem>>, vector<8x128xf32>
    %69 = vector.shape_cast %67 : vector<16x128xf32> to vector<2x8x128xf32>
    %cst_25 = arith.constant dense<0.000000e+00> : vector<8x128xf32>
    %70 = vector.multi_reduction <add>, %69, %cst_25 [0] : vector<2x8x128xf32> to vector<8x128xf32>
    %71 = arith.addf %68, %70 : vector<8x128xf32>
    %c0_26 = arith.constant 0 : index
    %c0_27 = arith.constant 0 : index
    %72 = vector.load %arg5[%c0_26, %c0_27] : memref<8x128xf32, #tpu.memory_space<vmem>>, vector<8x128xf32>
    tpu.vector_store %arg5[%c0_26, %c0_27], %71 {strides = array<i32>} : memref<8x128xf32, #tpu.memory_space<vmem>>, vector<8x128xf32>,
    return
  }
  func.func @transform_0(%arg0: i32, %arg1: i32) -> (i32, i32) {
    %c1_i32 = arith.constant 1 : i32
    %0 = arith.muli %arg0, %c1_i32 : i32
    %1 = arith.addi %0, %arg1 : i32
    %c0_i32 = arith.constant 0 : i32
    %c0_i32_0 = arith.constant 0 : i32
    return %1, %c0_i32 : i32, i32
  }
  func.func @transform_1(%arg0: i32, %arg1: i32) -> (i32, i32) {
    %c1_i32 = arith.constant 1 : i32
    %0 = arith.muli %arg0, %c1_i32 : i32
    %1 = arith.addi %0, %arg1 : i32
    %c0_i32 = arith.constant 0 : i32
    %c0_i32_0 = arith.constant 0 : i32
    return %1, %c0_i32 : i32, i32
  }
  func.func @transform_2(%arg0: i32, %arg1: i32) -> (i32, i32) {
    %c1_i32 = arith.constant 1 : i32
    %0 = arith.muli %arg0, %c1_i32 : i32
    %1 = arith.addi %0, %arg1 : i32
    %c0_i32 = arith.constant 0 : i32
    %c0_i32_0 = arith.constant 0 : i32
    return %1, %c0_i32 : i32, i32
  }
  func.func @transform_3(%arg0: i32, %arg1: i32) -> (i32, i32) {
    %c0_i32 = arith.constant 0 : i32
    %c0_i32_0 = arith.constant 0 : i32
    return %arg0, %c0_i32 : i32, i32
  }
}

</mosaic_0001>

<llo_original>
// kernel: tpu_custom_call.1
$region0: #{tpu_custom_call.1}
  #allocation0 [shape = 'u32[]', space=smem, size = 0x4, offset = 0x4, fixed_abs, tag = 'smem constant byte address 0x4 - core index']
  #allocation1 [shape = 'u32[144,128]{1,0:T(1,128)}', space=vmem, size = 0x12000, scoped, tag = 'internal scratch']
  %s0 = inlined_call_operand.hbm [shape: f32[16,128], index: 0, kind: input, shape index: {}]
  %s1 = inlined_call_operand.hbm [shape: f32[16,128], index: 1, kind: input, shape index: {}]
  %s2 = inlined_call_operand.hbm [shape: bf16[16,128], index: 2, kind: input, shape index: {}]
  %s3 = inlined_call_operand.hbm [shape: f32[8,128], index: 3, kind: output, shape index: {}]
  %s4 = sld [smem:[#allocation0]]
  $region38: #{tpu_custom_call.1} parent=0
    _
  %s6 = ssub.s32 1, %s4
  %s7 = scalar_select 0, %s6, %s4
  $region1: #{tpu_custom_call.1} parent=0
    #allocation2 [shape = 'u8[8192]{0}', space=vmem, size = 0x2000, scoped, tag = 'input window, operand 0, single buffered']
    #allocation3 [shape = 's32[1]{0}', space=sflag, size = 0x4, scoped, tag = 'scoped memory for tpu_custom_call.1']
    #allocation4 [shape = 's32[1]{0}', space=sflag, size = 0x4, scoped, tag = 'scoped memory for tpu_custom_call.1']
    #allocation5 [shape = 'u8[8192]{0}', space=vmem, size = 0x2000, scoped, tag = 'input window, operand 1, single buffered']
    #allocation6 [shape = 's32[1]{0}', space=sflag, size = 0x4, scoped, tag = 'scoped memory for tpu_custom_call.1']
    #allocation7 [shape = 'u8[4096]{0}', space=vmem, size = 0x1000, scoped, tag = 'input window, operand 2, single buffered']
    #allocation8 [shape = 'u8[4096]{0}', space=vmem, size = 0x1000, scoped, tag = 'output window, operand 0, single buffered']
    %8 = vsyncpa [#allocation3], 0
    %9 = vsyncpa [#allocation6], 0
    %10 = vsyncpa [#allocation4], 0
    // Predicated region
    $region2: #{tpu_custom_call.1} parent=1 // pred_check
      _
    $region3: #{tpu_custom_call.1} parent=1 // pred_check_branch
      %12 = sbr.rel (0) target = $region5
    $region4: #{tpu_custom_call.1} parent=1 // pred_region
      %s13 = sadd.s32 0, 0
      %s14 = smul.u32 2, %s13
      %s16 = ssub.s32 256, 256
      %17 = vsyncadd [#allocation3], %s16
      %s18 = smul.addr %s14, 128
      %s19 = scalar_lea.hbm %s0, %s18
      %s20 = sshll.u32 [#allocation2], 4
      %s21 = int_to_ptr.vmem [resolvable:$true] %s20
      %26 = dma.hbm_to_vmem [thread:$0]  %s19, 256, %s21, [#allocation3], 128, 128, 8
    $region5: #{tpu_custom_call.1} parent=1 // pred_fallthru
      _
    // Predicated region
    $region6: #{tpu_custom_call.1} parent=1 // pred_check
      _
    $region7: #{tpu_custom_call.1} parent=1 // pred_check_branch
      %28 = sbr.rel (0) target = $region9
    $region8: #{tpu_custom_call.1} parent=1 // pred_region
      %s29 = sadd.s32 0, 0
      %s30 = smul.u32 2, %s29
      %s32 = ssub.s32 256, 256
      %33 = vsyncadd [#allocation6], %s32
      %s34 = smul.addr %s30, 128
      %s35 = scalar_lea.hbm %s1, %s34
      %s36 = sshll.u32 [#allocation5], 4
      %s37 = int_to_ptr.vmem [resolvable:$true] %s36
      %42 = dma.hbm_to_vmem [thread:$0]  %s35, 256, %s37, [#allocation6], 128, 128, 8
    $region9: #{tpu_custom_call.1} parent=1 // pred_fallthru
      _
    // Predicated region
    $region10: #{tpu_custom_call.1} parent=1 // pred_check
      _
    $region11: #{tpu_custom_call.1} parent=1 // pred_check_branch
      %44 = sbr.rel (0) target = $region13
    $region12: #{tpu_custom_call.1} parent=1 // pred_region
      %s45 = sadd.s32 0, 0
      %s46 = smul.u32 2, %s45
      %s48 = ssub.s32 128, 128
      %49 = vsyncadd [#allocation6], %s48
      %s50 = smul.addr %s46, 64
      %s51 = scalar_lea.hbm %s2, %s50
      %s52 = sshll.u32 [#allocation7], 4
      %s53 = int_to_ptr.vmem [resolvable:$true] %s52
      %58 = dma.hbm_to_vmem [thread:$0]  %s51, 128, %s53, [#allocation6], 64, 64, 4
    $region13: #{tpu_custom_call.1} parent=1 // pred_fallthru
      _
    // Predicated region
    $region14: #{tpu_custom_call.1} parent=1 // pred_check
      _
    $region15: #{tpu_custom_call.1} parent=1 // pred_check_branch
      %60 = sbr.rel (0) target = $region17
    $region16: #{tpu_custom_call.1} parent=1 // pred_region
      %61 = dma.done [#allocation3], 256
    $region17: #{tpu_custom_call.1} parent=1 // pred_fallthru
      _
    // Predicated region
    $region18: #{tpu_custom_call.1} parent=1 // pred_check
      _
    $region19: #{tpu_custom_call.1} parent=1 // pred_check_branch
      %63 = sbr.rel (0) target = $region21
    $region20: #{tpu_custom_call.1} parent=1 // pred_region
      %64 = dma.done [#allocation6], 256
    $region21: #{tpu_custom_call.1} parent=1 // pred_fallthru
      _
    // Predicated region
    $region22: #{tpu_custom_call.1} parent=1 // pred_check
      _
    $region23: #{tpu_custom_call.1} parent=1 // pred_check_branch
      %66 = sbr.rel (0) target = $region25
    $region24: #{tpu_custom_call.1} parent=1 // pred_region
      %67 = dma.done [#allocation6], 128
    $region25: #{tpu_custom_call.1} parent=1 // pred_fallthru
      _
    %s68 = sadd.s32 0, 0
    %s69 = smul.u32 2, %s68
    %s70 = sadd.s32 0, 0
    %s71 = smul.u32 2, %s70
    %s72 = sadd.s32 0, 0
    %s73 = smul.u32 2, %s72
    %p74 = scmp.eq.s32.totalorder 0, 0
    // Predicated region
    $region26: #{tpu_custom_call.1} parent=1 // pred_check
      %p75 = pneg %p74
    $region27: #{tpu_custom_call.1} parent=1 // pred_check_branch
      %77 = sbr.rel (%p75) target = $region29
    $region28: #{tpu_custom_call.1} parent=1 // pred_region
      %78 = vst [vmem:[#allocation8] sm:$0xff] 0.0
    $region29: #{tpu_custom_call.1} parent=1 // pred_fallthru
      _
    %v79 = vld [vmem:[#allocation2] sm:$0xff]
    %v80 = vld [vmem:[#allocation2 + $0x8] sm:$0xff]
    %v81 = vld [vmem:[#allocation5] sm:$0xff]
    %v82 = vld [vmem:[#allocation5 + $0x8] sm:$0xff]
    %v83 = vld [vmem:[#allocation7] sm:$0xf]
    %v84 = vld [vmem:[#allocation7 + $0x4] sm:$0xf]
    %v85 = vunpack.c.l.bf16 %v83
    %v86 = vunpack.c.l.bf16 %v84
    %v87 = vmul.f32 %v85, 2.0
    %v88 = vmul.f32 %v86, 2.0
    %v89 = vsub.f32 1.0, %v87
    %v90 = vsub.f32 1.0, %v88
    %v91 = vmul.f32 %v85, -0.5
    %v92 = vmul.f32 %v86, -0.5
    %v93 = vadd.f32 %v91, 0.75
    %v94 = vadd.f32 %v92, 0.75
    %v95 = vand.u32 2147483647, %v79
    %v96 = vand.u32 2147483647, %v80
    %v97 = vsub.f32 0.0, %v95
    %v98 = vsub.f32 0.0, %v96
    %v99 = vmul.f32 %v97, 1.442695
    %v100 = vpow.pop %v99
    %v101 = vmul.f32 %v98, 1.442695
    %v102 = vpow.pop %v101
    %v103 = vmax.f32 %v79, 0.0
    %v104 = vmax.f32 %v80, 0.0
    %v105 = vmul.f32 %v79, %v85
    %v106 = vmul.f32 %v80, %v86
    %v107 = vsub.f32 %v103, %v105
    %v108 = vsub.f32 %v104, %v106
    %v109 = vadd.f32 %v100, 1.0
    %v110 = vlog2.pop %v109
    %v111 = vmul.f32 %v110, 0.6931472
    %v112 = vmul.f32 -0.5, %v100
    %v113 = vadd.f32 %v112, 1.0
    %v114 = vmul.f32 %v113, %v100
    %v115 = vand.u32 2147483647, %v100
    %vm116 = vcmp.lt.f32.partialorder %v115, 0.0004427343
    %v117 = vsel %vm116, %v114, %v111
    %v118 = vadd.f32 %v102, 1.0
    %v119 = vlog2.pop %v118
    %v120 = vmul.f32 %v119, 0.6931472
    %v121 = vmul.f32 -0.5, %v102
    %v122 = vadd.f32 %v121, 1.0
    %v123 = vmul.f32 %v122, %v102
    %v124 = vand.u32 2147483647, %v102
    %vm125 = vcmp.lt.f32.partialorder %v124, 0.0004427343
    %v126 = vsel %vm125, %v123, %v120
    %v127 = vadd.f32 %v107, %v117
    %v128 = vadd.f32 %v108, %v126
    %v129 = vadd.f32 %v100, 1.0
    %v130 = vadd.f32 %v102, 1.0
    %v131 = vrcp.pop %v129
    %v132 = vmul.f32 1.0, %v131
    %v133 = vrcp.pop %v130
    %v134 = vmul.f32 1.0, %v133
    %vm135 = vcmp.ge.f32.partialorder %v79, 0.0
    %vm136 = vcmp.ge.f32.partialorder %v80, 0.0
    %v137 = vsel %vm135, 1.0, %v100
    %v138 = vsel %vm136, 1.0, %v102
    %v139 = vmul.f32 %v132, %v137
    %v140 = vmul.f32 %v134, %v138
    %v141 = vmul.f32 %v139, %v89
    %v142 = vmul.f32 %v140, %v90
    %v143 = vadd.f32 %v85, %v141
    %v144 = vadd.f32 %v86, %v142
    %v145 = vmul.f32 %v143, %v143
    %v146 = vmul.f32 %v144, %v144
    %v147 = vmul.f32 %v93, %v145
    %v148 = vmul.f32 %v94, %v146
    %v149 = vmul.f32 %v147, %v127
    %v150 = vmul.f32 %v148, %v128
    %v151 = vmul.f32 %v149, 0.4
    %v152 = vmul.f32 %v150, 0.4
    %v153 = vand.u32 2147483647, %v81
    %v154 = vand.u32 2147483647, %v82
    %v155 = vsub.f32 0.0, %v153
    %v156 = vsub.f32 0.0, %v154
    %v157 = vmul.f32 %v155, 1.442695
    %v158 = vpow.pop %v157
    %v159 = vmul.f32 %v156, 1.442695
    %v160 = vpow.pop %v159
    %v161 = vmax.f32 %v81, 0.0
    %v162 = vmax.f32 %v82, 0.0
    %v163 = vmul.f32 %v81, %v85
    %v164 = vmul.f32 %v82, %v86
    %v165 = vsub.f32 %v161, %v163
    %v166 = vsub.f32 %v162, %v164
    %v167 = vadd.f32 %v158, 1.0
    %v168 = vlog2.pop %v167
    %v169 = vmul.f32 %v168, 0.6931472
    %v170 = vmul.f32 -0.5, %v158
    %v171 = vadd.f32 %v170, 1.0
    %v172 = vmul.f32 %v171, %v158
    %v173 = vand.u32 2147483647, %v158
    %vm174 = vcmp.lt.f32.partialorder %v173, 0.0004427343
    %v175 = vsel %vm174, %v172, %v169
    %v176 = vadd.f32 %v160, 1.0
    %v177 = vlog2.pop %v176
    %v178 = vmul.f32 %v177, 0.6931472
    %v179 = vmul.f32 -0.5, %v160
    %v180 = vadd.f32 %v179, 1.0
    %v181 = vmul.f32 %v180, %v160
    %v182 = vand.u32 2147483647, %v160
    %vm183 = vcmp.lt.f32.partialorder %v182, 0.0004427343
    %v184 = vsel %vm183, %v181, %v178
    %v185 = vadd.f32 %v165, %v175
    %v186 = vadd.f32 %v166, %v184
    %v187 = vadd.f32 %v158, 1.0
    %v188 = vadd.f32 %v160, 1.0
    %v189 = vrcp.pop %v187
    %v190 = vmul.f32 1.0, %v189
    %v191 = vrcp.pop %v188
    %v192 = vmul.f32 1.0, %v191
    %vm193 = vcmp.ge.f32.partialorder %v81, 0.0
    %vm194 = vcmp.ge.f32.partialorder %v82, 0.0
    %v195 = vsel %vm193, 1.0, %v158
    %v196 = vsel %vm194, 1.0, %v160
    %v197 = vmul.f32 %v190, %v195
    %v198 = vmul.f32 %v192, %v196
    %v199 = vmul.f32 %v197, %v89
    %v200 = vmul.f32 %v198, %v90
    %v201 = vadd.f32 %v85, %v199
    %v202 = vadd.f32 %v86, %v200
    %v203 = vmul.f32 %v201, %v201
    %v204 = vmul.f32 %v202, %v202
    %v205 = vmul.f32 %v93, %v203
    %v206 = vmul.f32 %v94, %v204
    %v207 = vmul.f32 %v205, %v185
    %v208 = vmul.f32 %v206, %v186
    %v209 = vmul.f32 %v207, 0.6
    %v210 = vmul.f32 %v208, 0.6
    %v211 = vadd.f32 %v151, %v209
    %v212 = vadd.f32 %v152, %v210
    %v213 = vld [vmem:[#allocation8] sm:$0xff]
    %v214 = vadd.f32 %v211, %v212
    %v215 = vadd.f32 %v213, %v214
    %216 = vst [vmem:[#allocation8] sm:$0xff] %v215
    // Predicated region
    $region30: #{tpu_custom_call.1} parent=1 // pred_check
      _
    $region31: #{tpu_custom_call.1} parent=1 // pred_check_branch
      %218 = sbr.rel (0) target = $region33
    $region32: #{tpu_custom_call.1} parent=1 // pred_region
      %s220 = ssub.s32 128, 128
      %221 = vsyncadd [#allocation4], %s220
      %s223 = sshll.u32 [#allocation8], 4
      %s224 = int_to_ptr.vmem [resolvable:$true] %s223
      %226 = dma.vmem_to_hbm [thread:$0]  %s224, 128, %s3, [#allocation4]
    $region33: #{tpu_custom_call.1} parent=1 // pred_fallthru
      _
    // Predicated region
    $region34: #{tpu_custom_call.1} parent=1 // pred_check
      _
    $region35: #{tpu_custom_call.1} parent=1 // pred_check_branch
      %228 = sbr.rel (0) target = $region37
    $region36: #{tpu_custom_call.1} parent=1 // pred_region
      %229 = dma.done [#allocation4], 128
    $region37: #{tpu_custom_call.1} parent=1 // pred_fallthru
      _
    %230 = vsyncpa [#allocation3], 1
    %231 = vsyncpa [#allocation6], 1
    %232 = vsyncpa [#allocation4], 1

</llo_original>
